<compile_context>
chip_gen: v7x
topology: tpu7x:2x2x1
jax: 0.10.0
libtpu: 0.0.40
codegen_flags: <defaults>
</compile_context>

<pallas_src>
import jax
import jax.numpy as jnp
import numpy as np
from jax import lax
from jax.experimental import pallas as pl
from jax.experimental.pallas import tpu as pltpu


_MAX_TM = 8192    # max rows per batch tile (~768 KiB of f32 state per tile)
_PAD_MAX = 8192   # up to this B a single padded call beats a second tail call


def _round_up(x, m):
    return ((x + m - 1) // m) * m


def _num_tensorcores():
    """2 on chips whose TensorCores share the 'parallel' grid axis, else 1."""
    try:
        kind = jax.devices()[0].device_kind.lower()
    except Exception:
        return 1
    return 2 if ("v7" in kind or "v4" in kind) else 1


def qtran_v_kernel(x_ref,
                   w1_ref, b1_ref,
                   w2_ref, b2_ref,
                   w3_ref, b3_ref,
                   w4_ref, b4_ref,
                   out_ref):
    """Full 4-layer MLP for one batch tile of tm rows.

    Hidden matmuls run on the MXU with f32 accumulation; bias add + ReLU on the
    VPU in f32.  The final 1-wide layer is a transposed-RHS contraction
    (q@k^T pattern) that directly yields a lane-dense (1, tm) row.
    """
    cdt = w1_ref.dtype                       # compute dtype (f32 or bf16)
    x = x_ref[...].astype(cdt)               # per-tile cast; no-op in f32 path

    h = jnp.dot(x, w1_ref[...], preferred_element_type=jnp.float32)   # (tm, H)
    h = jnp.maximum(h + b1_ref[...], 0.0).astype(cdt)

    h = jnp.dot(h, w2_ref[...], preferred_element_type=jnp.float32)   # (tm, H)
    h = jnp.maximum(h + b2_ref[...], 0.0).astype(cdt)

    h = jnp.dot(h, w3_ref[...], preferred_element_type=jnp.float32)   # (tm, H)
    h = jnp.maximum(h + b3_ref[...], 0.0).astype(cdt)                 # one cast for layer 4

    # Final layer: v[b] = sum_j h[b, j] * w4[j] + b4, computed as the
    # contraction of (8, H) x (tm, H) over the last dims -> (8, tm) (LHS rows
    # are replicas of w4; take row 0).  Same dimension_numbers as flash
    # attention's q@k^T, so it stays MXU-native (no XLU transpose of h), and
    # the result is already batch-on-lanes.
    vt = lax.dot_general(w4_ref[...], h,
                         dimension_numbers=(((1,), (1,)), ((), ())),
                         preferred_element_type=jnp.float32)          # (8, tm)
    v = vt[0:1, :] + b4_ref[...]                                      # (1, tm)

    out_ref[...] = v[None].astype(out_ref.dtype)                      # (1, 1, tm)


def _forward_call(x, ops, *, tm, grid):
    """One pallas_call over rows [0, grid*tm) of x; returns flat f32 (grid*tm,)."""
    S = x.shape[1]
    H = ops[0].shape[1]
    # Grid-invariant (constant index_map) operand spec => no re-DMA across steps.
    full = lambda r, c: pl.BlockSpec((r, c), lambda i: (0, 0))

    out = pl.pallas_call(
        qtran_v_kernel,
        out_shape=jax.ShapeDtypeStruct((grid, 1, tm), jnp.float32),
        grid_spec=pltpu.PrefetchScalarGridSpec(
            num_scalar_prefetch=0,
            grid=(grid,),
            in_specs=[
                pl.BlockSpec((tm, S), lambda i: (i, 0)),   # state tile
                full(S, H), full(1, H),                    # layer 1
                full(H, H), full(1, H),                    # layer 2
                full(H, H), full(1, H),                    # layer 3
                full(8, H), full(1, 1),                    # layer 4 (row-replicated w4)
            ],
            # Lane-dense output: one (1, tm) row per grid step (batch on lanes).
            out_specs=pl.BlockSpec((1, 1, tm), lambda i: (i, 0, 0)),
        ),
        compiler_params=pltpu.CompilerParams(
            dimension_semantics=("parallel",)),
    )(x, *ops)
    return out.reshape(-1)


def qtran_v(state, params, *, tm=None, compute_dtype=None, num_tensorcores=None):
    """state: (B, state_shape) -> (B, 1) f32 value estimates."""
    B, S = state.shape
    (w1, b1), (w2, b2), (w3, b3), (w4, b4) = params
    H = w1.shape[1]
    cdt = compute_dtype if compute_dtype is not None else state.dtype

    # Operand prep (tiny, ~13 KiB total).  The state is NOT cast or copied here:
    # it stays in its original dtype in HBM and is cast per tile in-kernel, so
    # the kernel's HBM read is the only full pass over it.  Biases stay f32.
    w1c, w2c, w3c = (w.astype(cdt) for w in (w1, w2, w3))
    # Final-layer weight as an 8-row replicated (8, H) slab so the last-layer
    # contraction has a native 8-sublane LHS, kept in the compute dtype.
    w4r = jnp.broadcast_to(w4.reshape(1, H), (8, H)).astype(cdt)
    b1f = b1.reshape(1, H).astype(jnp.float32)
    b2f = b2.reshape(1, H).astype(jnp.float32)
    b3f = b3.reshape(1, H).astype(jnp.float32)
    b4f = b4.reshape(1, 1).astype(jnp.float32)
    ops = (w1c, b1f, w2c, b2f, w3c, b3f, w4r, b4f)

    num_tc = num_tensorcores if num_tensorcores is not None else _num_tensorcores()

    if tm is None:
        if B <= _PAD_MAX:
            # Small/medium batch: a single call.  Pad only the small amount
            # needed for an 8/128-aligned lane-dense tile; one tile per
            # TensorCore so a 2-TC chip splits the "parallel" grid, a single
            # step on 1-TC v5e/v6e (no pointless 0.35us extra step).
            if B <= 128:
                grid, tm_ = 1, _round_up(max(B, 8), 8)
            else:
                grid = num_tc
                tm_ = _round_up(pl.cdiv(B, grid), 128)
            Bp = grid * tm_
            x = state if Bp == B else jnp.pad(state, ((0, Bp - B), (0, 0)))
            return _forward_call(x, ops, tm=tm_, grid=grid)[:B].reshape(B, 1)
        # Large batch: big tiles (up to _MAX_TM rows), grid a multiple of
        # num_tc (even grid on v7x), and NO whole-array pad -- full tiles read
        # the original state in place; leftovers go through a tiny tail call.
        steps = _round_up(max(num_tc, pl.cdiv(B, _MAX_TM)), num_tc)
        tm = max(128, ((B // steps) // 128) * 128)
    else:
        tm = max(8, _round_up(tm, 8))

    n_full = B // tm
    parts = []
    if n_full > 0:
        # Grid covers only the full blocks of the (unpadded, uncopied) state.
        parts.append(_forward_call(state, ops, tm=tm, grid=n_full))
    tail = B - n_full * tm
    if tail > 0:
        x_tail = state if n_full == 0 else state[n_full * tm:]
        tm_tail = _round_up(tail, 8)
        if tm_tail != tail:
            x_tail = jnp.pad(x_tail, ((0, tm_tail - tail), (0, 0)))
        parts.append(_forward_call(x_tail, ops, tm=tm_tail, grid=1)[:tail])
    flat = parts[0] if len(parts) == 1 else jnp.concatenate(parts)
    return flat.reshape(B, 1)


def init_params(key, state_shape, hidden_dim, b_init_value=0.01):
    """Deterministic init mirroring the PyTorch module.

    PyTorch fanin_init on an nn.Linear weight of shape (out, in) uses
    fan_in = size[0] = out_features, so bound = 1/sqrt(out_features).
    Biases are filled with 0.01.  Weights here are stored (in, out).
    """
    dims = [(state_shape, hidden_dim),
            (hidden_dim, hidden_dim),
            (hidden_dim, hidden_dim),
            (hidden_dim, 1)]
    params = []
    for (fan_in, fan_out) in dims:
        key, wk = jax.random.split(key)
        bound = 1.0 / np.sqrt(fan_out)          # matches fanin_init's size[0]
        w = jax.random.uniform(wk, (fan_in, fan_out), jnp.float32,
                               minval=-bound, maxval=bound)
        b = jnp.full((1, fan_out), b_init_value, dtype=jnp.float32)
        params.append((w, b))
    return params


def qtran_v_ref(state, params):
    """Pure-JAX reference for correctness check."""
    (w1, b1), (w2, b2), (w3, b3), (w4, b4) = params
    h = jax.nn.relu(state @ w1 + b1)
    h = jax.nn.relu(h @ w2 + b2)
    h = jax.nn.relu(h @ w3 + b3)
    return h @ w4 + b4


if __name__ == "__main__":
    STATE_SHAPE = 24    # args.state_shape
    HIDDEN = 32         # args.qtran_hidden_dim

    key = jax.random.PRNGKey(0)
    key, sk = jax.random.split(key)
    params = init_params(key, STATE_SHAPE, HIDDEN)

    # Case 1: small batch, f32, jitted, tight check (single 16-row tile).
    B = 16
    state = jax.random.normal(sk, (B, STATE_SHAPE), dtype=jnp.float32)
    v = jax.block_until_ready(jax.jit(lambda s: qtran_v(s, params))(state))
    v_ref = qtran_v_ref(state, params)
    np.testing.assert_allclose(np.asarray(v), np.asarray(v_ref),
                               rtol=1e-5, atol=1e-5)
    assert v.shape == (B, 1) and v.dtype == jnp.float32

    # Case 2: user tile that does not divide B -> full-block main call plus a
    # tiny tail call (exercises the no-whole-array-pad split path).
    B2 = 50
    key, sk2 = jax.random.split(key)
    state2 = jax.random.normal(sk2, (B2, STATE_SHAPE), dtype=jnp.float32)
    v2 = jax.block_until_ready(qtran_v(state2, params, tm=32))
    np.testing.assert_allclose(np.asarray(v2),
                               np.asarray(qtran_v_ref(state2, params)),
                               rtol=1e-5, atol=1e-5)
    assert v2.shape == (B2, 1)

    # Case 3: medium batch, auto plan forced to a 2-TensorCore layout
    # (exercises the 128-rounded lane-dense tile and the even "parallel" grid).
    B3 = 300
    key, sk3 = jax.random.split(key)
    state3 = jax.random.normal(sk3, (B3, STATE_SHAPE), dtype=jnp.float32)
    v3 = jax.block_until_ready(qtran_v(state3, params, num_tensorcores=2))
    np.testing.assert_allclose(np.asarray(v3),
                               np.asarray(qtran_v_ref(state3, params)),
                               rtol=1e-5, atol=1e-5)
    assert v3.shape == (B3, 1)

    # Case 4: bf16 compute path — weights bf16, state stays f32 in HBM and is
    # cast per tile in-kernel; all accumulation / bias / ReLU stay f32.
    v4 = jax.block_until_ready(
        qtran_v(state, params, compute_dtype=jnp.bfloat16))
    np.testing.assert_allclose(np.asarray(v4), np.asarray(v_ref),
                               rtol=5e-2, atol=5e-2)

    print("KERNEL_OK")
</pallas_src>

<mosaic_0001>
module attributes {stable_mosaic.version = 11 : i64} {
  func.func @qtran_v_kernel(%arg0: i32, %arg1: memref<16x24xf32, #tpu.memory_space<vmem>>, %arg2: memref<24x32xf32, #tpu.memory_space<vmem>>, %arg3: memref<1x32xf32, #tpu.memory_space<vmem>>, %arg4: memref<32x32xf32, #tpu.memory_space<vmem>>, %arg5: memref<1x32xf32, #tpu.memory_space<vmem>>, %arg6: memref<32x32xf32, #tpu.memory_space<vmem>>, %arg7: memref<1x32xf32, #tpu.memory_space<vmem>>, %arg8: memref<8x32xf32, #tpu.memory_space<vmem>>, %arg9: memref<1x1xf32, #tpu.memory_space<vmem>>, %arg10: memref<1x1x16xf32, #tpu.memory_space<vmem>>) attributes {dimension_semantics = [#tpu.dimension_semantics<parallel>], iteration_bounds = array<i64: 1>, scalar_prefetch = 0 : i64, scratch_operands = 0 : i64, tpu.core_type = #tpu.core_type<tc>, window_params = [{transform_indices = @transform_0, window_bounds = array<i64: 16, 24>}, {pipeline_mode = #tpu.pipeline_mode<synchronous>, transform_indices = @transform_1, window_bounds = array<i64: 24, 32>}, {pipeline_mode = #tpu.pipeline_mode<synchronous>, transform_indices = @transform_2, window_bounds = array<i64: 1, 32>}, {pipeline_mode = #tpu.pipeline_mode<synchronous>, transform_indices = @transform_3, window_bounds = array<i64: 32, 32>}, {pipeline_mode = #tpu.pipeline_mode<synchronous>, transform_indices = @transform_4, window_bounds = array<i64: 1, 32>}, {pipeline_mode = #tpu.pipeline_mode<synchronous>, transform_indices = @transform_5, window_bounds = array<i64: 32, 32>}, {pipeline_mode = #tpu.pipeline_mode<synchronous>, transform_indices = @transform_6, window_bounds = array<i64: 1, 32>}, {pipeline_mode = #tpu.pipeline_mode<synchronous>, transform_indices = @transform_7, window_bounds = array<i64: 8, 32>}, {pipeline_mode = #tpu.pipeline_mode<synchronous>, transform_indices = @transform_8, window_bounds = array<i64: 1, 1>}, {transform_indices = @transform_9, window_bounds = array<i64: 1, 1, 16>}]} {
    %c0 = arith.constant 0 : index
    %c0_0 = arith.constant 0 : index
    %0 = vector.load %arg1[%c0, %c0_0] : memref<16x24xf32, #tpu.memory_space<vmem>>, vector<16x24xf32>
    %c0_1 = arith.constant 0 : index
    %c0_2 = arith.constant 0 : index
    %1 = vector.load %arg2[%c0_1, %c0_2] : memref<24x32xf32, #tpu.memory_space<vmem>>, vector<24x32xf32>
    %cst = arith.constant dense<0.000000e+00> : vector<16x32xf32>
    %2 = tpu.matmul %0, %1, %cst {dimension_numbers = #tpu.dot_dimension_numbers<[1], [0], [0], [1], [0, 0, 1, 1], [], []>} : vector<16x24xf32>, vector<24x32xf32>, vector<16x32xf32> -> vector<16x32xf32>
    %c0_3 = arith.constant 0 : index
    %c0_4 = arith.constant 0 : index
    %3 = vector.load %arg3[%c0_3, %c0_4] : memref<1x32xf32, #tpu.memory_space<vmem>>, vector<1x32xf32>
    %4 = vector.broadcast %3 : vector<1x32xf32> to vector<16x32xf32>
    %5 = arith.addf %2, %4 : vector<16x32xf32>
    %cst_5 = arith.constant 0.000000e+00 : f32
    %6 = vector.broadcast %cst_5 : f32 to vector<16x32xf32>
    %7 = arith.maximumf %5, %6 : vector<16x32xf32>
    %c0_6 = arith.constant 0 : index
    %c0_7 = arith.constant 0 : index
    %8 = vector.load %arg4[%c0_6, %c0_7] : memref<32x32xf32, #tpu.memory_space<vmem>>, vector<32x32xf32>
    %cst_8 = arith.constant dense<0.000000e+00> : vector<16x32xf32>
    %9 = tpu.matmul %7, %8, %cst_8 {dimension_numbers = #tpu.dot_dimension_numbers<[1], [0], [0], [1], [0, 0, 1, 1], [], []>} : vector<16x32xf32>, vector<32x32xf32>, vector<16x32xf32> -> vector<16x32xf32>
    %c0_9 = arith.constant 0 : index
    %c0_10 = arith.constant 0 : index
    %10 = vector.load %arg5[%c0_9, %c0_10] : memref<1x32xf32, #tpu.memory_space<vmem>>, vector<1x32xf32>
    %11 = vector.broadcast %10 : vector<1x32xf32> to vector<16x32xf32>
    %12 = arith.addf %9, %11 : vector<16x32xf32>
    %cst_11 = arith.constant 0.000000e+00 : f32
    %13 = vector.broadcast %cst_11 : f32 to vector<16x32xf32>
    %14 = arith.maximumf %12, %13 : vector<16x32xf32>
    %c0_12 = arith.constant 0 : index
    %c0_13 = arith.constant 0 : index
    %15 = vector.load %arg6[%c0_12, %c0_13] : memref<32x32xf32, #tpu.memory_space<vmem>>, vector<32x32xf32>
    %cst_14 = arith.constant dense<0.000000e+00> : vector<16x32xf32>
    %16 = tpu.matmul %14, %15, %cst_14 {dimension_numbers = #tpu.dot_dimension_numbers<[1], [0], [0], [1], [0, 0, 1, 1], [], []>} : vector<16x32xf32>, vector<32x32xf32>, vector<16x32xf32> -> vector<16x32xf32>
    %c0_15 = arith.constant 0 : index
    %c0_16 = arith.constant 0 : index
    %17 = vector.load %arg7[%c0_15, %c0_16] : memref<1x32xf32, #tpu.memory_space<vmem>>, vector<1x32xf32>
    %18 = vector.broadcast %17 : vector<1x32xf32> to vector<16x32xf32>
    %19 = arith.addf %16, %18 : vector<16x32xf32>
    %cst_17 = arith.constant 0.000000e+00 : f32
    %20 = vector.broadcast %cst_17 : f32 to vector<16x32xf32>
    %21 = arith.maximumf %19, %20 : vector<16x32xf32>
    %c0_18 = arith.constant 0 : index
    %c0_19 = arith.constant 0 : index
    %22 = vector.load %arg8[%c0_18, %c0_19] : memref<8x32xf32, #tpu.memory_space<vmem>>, vector<8x32xf32>
    %cst_20 = arith.constant dense<0.000000e+00> : vector<8x16xf32>
    %23 = tpu.matmul %22, %21, %cst_20 {dimension_numbers = #tpu.dot_dimension_numbers<[1], [1], [0], [0], [0, 0, 1, 0], [], []>} : vector<8x32xf32>, vector<16x32xf32>, vector<8x16xf32> -> vector<8x16xf32>
    %24 = vector.extract_strided_slice %23 {offsets = [0, 0], sizes = [1, 16], strides = [1, 1]} : vector<8x16xf32> to vector<1x16xf32>
    %c0_21 = arith.constant 0 : index
    %c0_22 = arith.constant 0 : index
    %25 = vector.load %arg9[%c0_21, %c0_22] : memref<1x1xf32, #tpu.memory_space<vmem>>, vector<1x1xf32>
    %26 = vector.broadcast %25 : vector<1x1xf32> to vector<1x16xf32>
    %27 = arith.addf %24, %26 : vector<1x16xf32>
    %28 = vector.shape_cast %27 : vector<1x16xf32> to vector<1x1x16xf32>
    %c0_23 = arith.constant 0 : index
    %c0_24 = arith.constant 0 : index
    %c0_25 = arith.constant 0 : index
    %29 = vector.load %arg10[%c0_23, %c0_24, %c0_25] : memref<1x1x16xf32, #tpu.memory_space<vmem>>, vector<1x1x16xf32>
    tpu.vector_store %arg10[%c0_23, %c0_24, %c0_25], %28 {strides = array<i32>} : memref<1x1x16xf32, #tpu.memory_space<vmem>>, vector<1x1x16xf32>,
    return
  }
  func.func @transform_0(%arg0: i32) -> (i32, i32) {
    %c0_i32 = arith.constant 0 : i32
    %c0_i32_0 = arith.constant 0 : i32
    return %arg0, %c0_i32 : i32, i32
  }
  func.func @transform_1(%arg0: i32) -> (i32, i32) {
    %c0_i32 = arith.constant 0 : i32
    %c0_i32_0 = arith.constant 0 : i32
    %c0_i32_1 = arith.constant 0 : i32
    return %c0_i32, %c0_i32_0 : i32, i32
  }
  func.func @transform_2(%arg0: i32) -> (i32, i32) {
    %c0_i32 = arith.constant 0 : i32
    %c0_i32_0 = arith.constant 0 : i32
    %c0_i32_1 = arith.constant 0 : i32
    return %c0_i32, %c0_i32_0 : i32, i32
  }
  func.func @transform_3(%arg0: i32) -> (i32, i32) {
    %c0_i32 = arith.constant 0 : i32
    %c0_i32_0 = arith.constant 0 : i32
    %c0_i32_1 = arith.constant 0 : i32
    return %c0_i32, %c0_i32_0 : i32, i32
  }
  func.func @transform_4(%arg0: i32) -> (i32, i32) {
    %c0_i32 = arith.constant 0 : i32
    %c0_i32_0 = arith.constant 0 : i32
    %c0_i32_1 = arith.constant 0 : i32
    return %c0_i32, %c0_i32_0 : i32, i32
  }
  func.func @transform_5(%arg0: i32) -> (i32, i32) {
    %c0_i32 = arith.constant 0 : i32
    %c0_i32_0 = arith.constant 0 : i32
    %c0_i32_1 = arith.constant 0 : i32
    return %c0_i32, %c0_i32_0 : i32, i32
  }
  func.func @transform_6(%arg0: i32) -> (i32, i32) {
    %c0_i32 = arith.constant 0 : i32
    %c0_i32_0 = arith.constant 0 : i32
    %c0_i32_1 = arith.constant 0 : i32
    return %c0_i32, %c0_i32_0 : i32, i32
  }
  func.func @transform_7(%arg0: i32) -> (i32, i32) {
    %c0_i32 = arith.constant 0 : i32
    %c0_i32_0 = arith.constant 0 : i32
    %c0_i32_1 = arith.constant 0 : i32
    return %c0_i32, %c0_i32_0 : i32, i32
  }
  func.func @transform_8(%arg0: i32) -> (i32, i32) {
    %c0_i32 = arith.constant 0 : i32
    %c0_i32_0 = arith.constant 0 : i32
    %c0_i32_1 = arith.constant 0 : i32
    return %c0_i32, %c0_i32_0 : i32, i32
  }
  func.func @transform_9(%arg0: i32) -> (i32, i32, i32) {
    %c0_i32 = arith.constant 0 : i32
    %c0_i32_0 = arith.constant 0 : i32
    %c0_i32_1 = arith.constant 0 : i32
    return %arg0, %c0_i32, %c0_i32_0 : i32, i32, i32
  }
}

</mosaic_0001>

<llo_original>
// kernel: _lambda_.1
$region0: #{_lambda_.1}
  #allocation0 [shape = 'u32[]', space=smem, size = 0x4, offset = 0x4, fixed_abs, tag = 'smem constant byte address 0x4 - core index']
  #allocation1 [shape = 'u32[144,128]{1,0:T(1,128)}', space=vmem, size = 0x12000, scoped, tag = 'internal scratch']
  #allocation2 [shape = 'f32[1,1]{1,0:T(1,128)S(1)}', space=vmem, size = 0x200, scoped, tag = 'scoped memory for _lambda_.1']
  %s0 = inlined_call_operand.hbm [shape: f32[16,24], index: 0, kind: input, shape index: {}]
  %s1 = inlined_call_operand.vmem [shape: f32[24,32], index: 1, kind: input, shape index: {}]
  %s2 = inlined_call_operand.vmem [shape: f32[1,32], index: 2, kind: input, shape index: {}, may-alias: {2,4,6}]
  %s3 = inlined_call_operand.hbm [shape: f32[32,32], index: 3, kind: input, shape index: {}]
  %s4 = inlined_call_operand.vmem [shape: f32[1,32], index: 4, kind: input, shape index: {}, may-alias: {2,4,6}]
  %s5 = inlined_call_operand.hbm [shape: f32[32,32], index: 5, kind: input, shape index: {}]
  %s6 = inlined_call_operand.vmem [shape: f32[1,32], index: 6, kind: input, shape index: {}, may-alias: {2,4,6}]
  %s7 = inlined_call_operand.vmem [shape: f32[8,32], index: 7, kind: input, shape index: {}]
  %s8 = inlined_call_operand.<no memory space> [shape: f32[1,1], index: 8, kind: input, shape index: {}]
  %s9 = inlined_call_operand.hbm [shape: f32[1,1,16], index: 9, kind: output, shape index: {}]
  %s10 = sld [smem:[#allocation0]]
  $region58: #{_lambda_.1} parent=0
    _
  %s12 = ssub.s32 1, %s10
  %s13 = scalar_select 0, %s12, %s10
  %v14 = vstv %s8
  %15 = vst [vmem:[#allocation2] sm:$0x1] %v14
  $region1: #{_lambda_.1} parent=0
    #allocation3 [shape = 'u8[8192]{0}', space=vmem, size = 0x2000, scoped, tag = 'input window, operand 0, single buffered']
    #allocation4 [shape = 's32[1]{0}', space=sflag, size = 0x4, scoped, tag = 'scoped memory for _lambda_.1']
    #allocation5 [shape = 's32[1]{0}', space=sflag, size = 0x4, scoped, tag = 'scoped memory for _lambda_.1']
    #allocation6 [shape = 'u8[16384]{0}', space=vmem, size = 0x4000, scoped, tag = 'input window, operand 3, single buffered']
    #allocation7 [shape = 's32[1]{0}', space=sflag, size = 0x4, scoped, tag = 'scoped memory for _lambda_.1']
    #allocation8 [shape = 'u8[16384]{0}', space=vmem, size = 0x4000, scoped, tag = 'input window, operand 5, single buffered']
    #allocation9 [shape = 'u8[512]{0}', space=vmem, size = 0x400, scoped, tag = 'output window, operand 0, single buffered']
    %16 = vsyncpa [#allocation4], 0
    %17 = vsyncpa [#allocation7], 0
    %18 = vsyncpa [#allocation5], 0
    // Predicated region
    $region2: #{_lambda_.1} parent=1 // pred_check
      _
    $region3: #{_lambda_.1} parent=1 // pred_check_branch
      %20 = sbr.rel (0) target = $region5
    $region4: #{_lambda_.1} parent=1 // pred_region
      %s22 = ssub.s32 256, 256
      %23 = vsyncadd [#allocation4], %s22
      %s24 = sshll.u32 [#allocation3], 4
      %s25 = int_to_ptr.vmem [resolvable:$true] %s24
      %30 = dma.hbm_to_vmem [thread:$0]  %s0, 256, %s25, [#allocation4], 128, 128, 8
    $region5: #{_lambda_.1} parent=1 // pred_fallthru
      _
    // Predicated region
    $region6: #{_lambda_.1} parent=1 // pred_check
      _
    $region7: #{_lambda_.1} parent=1 // pred_check_branch
      %32 = sbr.rel (0) target = $region9
    $region8: #{_lambda_.1} parent=1 // pred_region
      _
    $region9: #{_lambda_.1} parent=1 // pred_fallthru
      _
    // Predicated region
    $region10: #{_lambda_.1} parent=1 // pred_check
      _
    $region11: #{_lambda_.1} parent=1 // pred_check_branch
      %34 = sbr.rel (0) target = $region13
    $region12: #{_lambda_.1} parent=1 // pred_region
      _
    $region13: #{_lambda_.1} parent=1 // pred_fallthru
      _
    // Predicated region
    $region14: #{_lambda_.1} parent=1 // pred_check
      _
    $region15: #{_lambda_.1} parent=1 // pred_check_branch
      %36 = sbr.rel (0) target = $region17
    $region16: #{_lambda_.1} parent=1 // pred_region
      %s38 = ssub.s32 512, 512
      %39 = vsyncadd [#allocation7], %s38
      %s40 = sshll.u32 [#allocation6], 4
      %s41 = int_to_ptr.vmem [resolvable:$true] %s40
      %46 = dma.hbm_to_vmem [thread:$0]  %s3, 512, %s41, [#allocation7], 128, 128, 8
    $region17: #{_lambda_.1} parent=1 // pred_fallthru
      _
    // Predicated region
    $region18: #{_lambda_.1} parent=1 // pred_check
      _
    $region19: #{_lambda_.1} parent=1 // pred_check_branch
      %48 = sbr.rel (0) target = $region21
    $region20: #{_lambda_.1} parent=1 // pred_region
      _
    $region21: #{_lambda_.1} parent=1 // pred_fallthru
      _
    // Predicated region
    $region22: #{_lambda_.1} parent=1 // pred_check
      _
    $region23: #{_lambda_.1} parent=1 // pred_check_branch
      %50 = sbr.rel (0) target = $region25
    $region24: #{_lambda_.1} parent=1 // pred_region
      %s52 = ssub.s32 512, 512
      %53 = vsyncadd [#allocation7], %s52
      %s54 = sshll.u32 [#allocation8], 4
      %s55 = int_to_ptr.vmem [resolvable:$true] %s54
      %60 = dma.hbm_to_vmem [thread:$0]  %s5, 512, %s55, [#allocation7], 128, 128, 8
    $region25: #{_lambda_.1} parent=1 // pred_fallthru
      _
    // Predicated region
    $region26: #{_lambda_.1} parent=1 // pred_check
      _
    $region27: #{_lambda_.1} parent=1 // pred_check_branch
      %62 = sbr.rel (0) target = $region29
    $region28: #{_lambda_.1} parent=1 // pred_region
      _
    $region29: #{_lambda_.1} parent=1 // pred_fallthru
      _
    // Predicated region
    $region30: #{_lambda_.1} parent=1 // pred_check
      _
    $region31: #{_lambda_.1} parent=1 // pred_check_branch
      %64 = sbr.rel (0) target = $region33
    $region32: #{_lambda_.1} parent=1 // pred_region
      _
    $region33: #{_lambda_.1} parent=1 // pred_fallthru
      _
    // Predicated region
    $region34: #{_lambda_.1} parent=1 // pred_check
      _
    $region35: #{_lambda_.1} parent=1 // pred_check_branch
      %66 = sbr.rel (0) target = $region37
    $region36: #{_lambda_.1} parent=1 // pred_region
      _
    $region37: #{_lambda_.1} parent=1 // pred_fallthru
      _
    // Predicated region
    $region38: #{_lambda_.1} parent=1 // pred_check
      _
    $region39: #{_lambda_.1} parent=1 // pred_check_branch
      %68 = sbr.rel (0) target = $region41
    $region40: #{_lambda_.1} parent=1 // pred_region
      %69 = dma.done [#allocation4], 256
    $region41: #{_lambda_.1} parent=1 // pred_fallthru
      _
    // Predicated region
    $region42: #{_lambda_.1} parent=1 // pred_check
      _
    $region43: #{_lambda_.1} parent=1 // pred_check_branch
      %71 = sbr.rel (0) target = $region45
    $region44: #{_lambda_.1} parent=1 // pred_region
      %72 = dma.done [#allocation7], 512
    $region45: #{_lambda_.1} parent=1 // pred_fallthru
      _
    // Predicated region
    $region46: #{_lambda_.1} parent=1 // pred_check
      _
    $region47: #{_lambda_.1} parent=1 // pred_check_branch
      %74 = sbr.rel (0) target = $region49
    $region48: #{_lambda_.1} parent=1 // pred_region
      %75 = dma.done [#allocation7], 512
    $region49: #{_lambda_.1} parent=1 // pred_fallthru
      _
    %v76 = vld [vmem:[#allocation3] sm:$0xff]
    %v77 = vld [vmem:[#allocation3 + $0x8] sm:$0xff]
    %v78 = vld [vmem:[%s1] sm:$0xff]
    %v79 = vld [vmem:[%s1 + $0x8] sm:$0xff]
    %v80 = vld [vmem:[%s1 + $0x10] sm:$0xff]
    %v81 = vld [vmem:[%s2] sm:$0x1]
    %v83 = vlaneseq
    %v84 = vshrl.u32 %v83, 7
    %v85 = vsub.s32 0, %v84
    %v86 = vrot.slane %v81, %v85
    %vm88 = vcmask 195584
    %v90 = vsel %vm88, %v76, 0
    %v93 = vsel %vm88, %v77, 0
    %95 = vmatprep.subr.mxu0 0.0
    %96 = vmatpush1.msra.mxu0 %v78
    %97 = vmatprep.subr.mxu0 0.0
    %98 = vmatpush1.msra.mxu0 %v79
    %99 = vmatprep.subr.mxu0 0.0
    %100 = vmatpush1.msra.mxu0 %v80
    %101 = vmatprep.subr.mxu0 0.0
    %102 = vmatpush1.msra.mxu0 0.0
    %103 = vmatprep.subr.mxu0 0.0
    %104 = vmatpush1.msra.mxu0 0.0
    %105 = vmatprep.subr.mxu0 0.0
    %106 = vmatpush1.msra.mxu0 0.0
    %107 = vmatprep.subr.mxu0 0.0
    %108 = vmatpush1.msra.mxu0 0.0
    %109 = vmatprep.subr.mxu0 0.0
    %110 = vmatpush1.msra.mxu0 0.0
    %111 = vmatprep.subr.mxu0 0.0
    %112 = vmatpush1.msra.mxu0 0.0
    %113 = vmatprep.subr.mxu0 0.0
    %114 = vmatpush1.msra.mxu0 0.0
    %115 = vmatprep.subr.mxu0 0.0
    %116 = vmatpush1.msra.mxu0 0.0
    %117 = vmatprep.subr.mxu0 0.0
    %118 = vmatpush1.msra.mxu0 0.0
    %119 = vmatprep.subr.mxu0 0.0
    %120 = vmatpush1.msra.mxu0 0.0
    %121 = vmatprep.subr.mxu0 0.0
    %122 = vmatpush1.msra.mxu0 0.0
    %123 = vmatprep.subr.mxu0 0.0
    %124 = vmatpush1.msra.mxu0 0.0
    %125 = vmatprep.subr.mxu0 0.0
    %126 = vmatpush1.msra.mxu0 0.0
    %127 = vmatprep.subr.mxu0 0.0
    %128 = vmatpush1.msra.mxu0 0.0
    %129 = vmatprep.subr.mxu0 0.0
    %130 = vmatpush1.msra.mxu0 0.0
    %131 = vmatprep.subr.mxu0 0.0
    %132 = vmatpush1.msra.mxu0 0.0
    %133 = vmatprep.subr.mxu0 0.0
    %134 = vmatpush1.msra.mxu0 0.0
    %135 = vmatprep.subr.mxu0 0.0
    %136 = vmatpush1.msra.mxu0 0.0
    %137 = vmatprep.subr.mxu0 0.0
    %138 = vmatpush1.msra.mxu0 0.0
    %139 = vmatprep.subr.mxu0 0.0
    %140 = vmatpush1.msra.mxu0 0.0
    %141 = vmatprep.subr.mxu0 0.0
    %142 = vmatpush1.msra.mxu0 0.0
    %143 = vmatprep.subr.mxu0 0.0
    %144 = vmatpush1.msra.mxu0 0.0
    %145 = vmatprep.subr.mxu0 0.0
    %146 = vmatpush1.msra.mxu0 0.0
    %147 = vmatprep.subr.mxu0 0.0
    %148 = vmatpush1.msra.mxu0 0.0
    %149 = vmatprep.subr.mxu0 0.0
    %150 = vmatpush1.msra.mxu0 0.0
    %151 = vmatprep.subr.mxu0 0.0
    %152 = vmatpush1.msra.mxu0 0.0
    %153 = vmatprep.subr.mxu0 0.0
    %154 = vmatpush1.msra.mxu0 0.0
    %155 = vmatprep.subr.mxu0 0.0
    %156 = vmatpush1.msra.mxu0 0.0
    %157 = vmatprep.subr.mxu0 0.0
    %158 = vmatpush1.msra.mxu0 0.0
    %159 = vmatprep.mubr.f32.mxu0 0.0
    %160 = vmatmul.mubr.f32.gmra.mrb[0].mxu0 %v90
    %v161 = vpop.f32.mrb[0].mxu0
    %v162 = vadd.f32 %v86, %v161
    %v163 = vpop.f32.mrb[0].mxu0
    %164 = vmatprep.mubr.f32.mxu0 0.0
    %165 = vmatmul.mubr.f32.gmra.mrb[0].mxu0 %v93
    %v166 = vpop.f32.mrb[0].mxu0
    %v167 = vadd.f32 %v86, %v166
    %v168 = vpop.f32.mrb[0].mxu0
    %169 = vdwg.mxu0
    %v170 = vmax.f32 %v162, 0.0
    %v171 = vmax.f32 %v167, 0.0
    %v172 = vld [vmem:[#allocation6] sm:$0xff]
    %v173 = vld [vmem:[#allocation6 + $0x8] sm:$0xff]
    %v174 = vld [vmem:[#allocation6 + $0x10] sm:$0xff]
    %v175 = vld [vmem:[#allocation6 + $0x18] sm:$0xff]
    %v176 = vld [vmem:[%s4] sm:$0x1]
    %v178 = vlaneseq
    %v179 = vshrl.u32 %v178, 7
    %v180 = vsub.s32 0, %v179
    %v181 = vrot.slane %v176, %v180
    %vm183 = vcmask 261120
    %v185 = vsel %vm183, %v170, 0
    %v188 = vsel %vm183, %v171, 0
    %190 = vmatprep.subr.mxu0 0.0
    %191 = vmatpush1.msra.mxu0 %v172
    %192 = vmatprep.subr.mxu0 0.0
    %193 = vmatpush1.msra.mxu0 %v173
    %194 = vmatprep.subr.mxu0 0.0
    %195 = vmatpush1.msra.mxu0 %v174
    %196 = vmatprep.subr.mxu0 0.0
    %197 = vmatpush1.msra.mxu0 %v175
    %198 = vmatprep.subr.mxu0 0.0
    %199 = vmatpush1.msra.mxu0 0.0
    %200 = vmatprep.subr.mxu0 0.0
    %201 = vmatpush1.msra.mxu0 0.0
    %202 = vmatprep.subr.mxu0 0.0
    %203 = vmatpush1.msra.mxu0 0.0
    %204 = vmatprep.subr.mxu0 0.0
    %205 = vmatpush1.msra.mxu0 0.0
    %206 = vmatprep.subr.mxu0 0.0
    %207 = vmatpush1.msra.mxu0 0.0
    %208 = vmatprep.subr.mxu0 0.0
    %209 = vmatpush1.msra.mxu0 0.0
    %210 = vmatprep.subr.mxu0 0.0
    %211 = vmatpush1.msra.mxu0 0.0
    %212 = vmatprep.subr.mxu0 0.0
    %213 = vmatpush1.msra.mxu0 0.0
    %214 = vmatprep.subr.mxu0 0.0
    %215 = vmatpush1.msra.mxu0 0.0
    %216 = vmatprep.subr.mxu0 0.0
    %217 = vmatpush1.msra.mxu0 0.0
    %218 = vmatprep.subr.mxu0 0.0
    %219 = vmatpush1.msra.mxu0 0.0
    %220 = vmatprep.subr.mxu0 0.0
    %221 = vmatpush1.msra.mxu0 0.0
    %222 = vmatprep.subr.mxu0 0.0
    %223 = vmatpush1.msra.mxu0 0.0
    %224 = vmatprep.subr.mxu0 0.0
    %225 = vmatpush1.msra.mxu0 0.0
    %226 = vmatprep.subr.mxu0 0.0
    %227 = vmatpush1.msra.mxu0 0.0
    %228 = vmatprep.subr.mxu0 0.0
    %229 = vmatpush1.msra.mxu0 0.0
    %230 = vmatprep.subr.mxu0 0.0
    %231 = vmatpush1.msra.mxu0 0.0
    %232 = vmatprep.subr.mxu0 0.0
    %233 = vmatpush1.msra.mxu0 0.0
    %234 = vmatprep.subr.mxu0 0.0
    %235 = vmatpush1.msra.mxu0 0.0
    %236 = vmatprep.subr.mxu0 0.0
    %237 = vmatpush1.msra.mxu0 0.0
    %238 = vmatprep.subr.mxu0 0.0
    %239 = vmatpush1.msra.mxu0 0.0
    %240 = vmatprep.subr.mxu0 0.0
    %241 = vmatpush1.msra.mxu0 0.0
    %242 = vmatprep.subr.mxu0 0.0
    %243 = vmatpush1.msra.mxu0 0.0
    %244 = vmatprep.subr.mxu0 0.0
    %245 = vmatpush1.msra.mxu0 0.0
    %246 = vmatprep.subr.mxu0 0.0
    %247 = vmatpush1.msra.mxu0 0.0
    %248 = vmatprep.subr.mxu0 0.0
    %249 = vmatpush1.msra.mxu0 0.0
    %250 = vmatprep.subr.mxu0 0.0
    %251 = vmatpush1.msra.mxu0 0.0
    %252 = vmatprep.subr.mxu0 0.0
    %253 = vmatpush1.msra.mxu0 0.0
    %254 = vmatprep.mubr.f32.mxu0 0.0
    %255 = vmatmul.mubr.f32.gmra.mrb[0].mxu0 %v185
    %v256 = vpop.f32.mrb[0].mxu0
    %v257 = vadd.f32 %v181, %v256
    %v258 = vpop.f32.mrb[0].mxu0
    %259 = vmatprep.mubr.f32.mxu0 0.0
    %260 = vmatmul.mubr.f32.gmra.mrb[0].mxu0 %v188
    %v261 = vpop.f32.mrb[0].mxu0
    %v262 = vadd.f32 %v181, %v261
    %v263 = vpop.f32.mrb[0].mxu0
    %264 = vdwg.mxu0
    %v265 = vmax.f32 %v257, 0.0
    %v266 = vmax.f32 %v262, 0.0
    %v267 = vld [vmem:[#allocation8] sm:$0xff]
    %v268 = vld [vmem:[#allocation8 + $0x8] sm:$0xff]
    %v269 = vld [vmem:[#allocation8 + $0x10] sm:$0xff]
    %v270 = vld [vmem:[#allocation8 + $0x18] sm:$0xff]
    %v271 = vld [vmem:[%s6] sm:$0x1]
    %v273 = vlaneseq
    %v274 = vshrl.u32 %v273, 7
    %v275 = vsub.s32 0, %v274
    %v276 = vrot.slane %v271, %v275
    %v279 = vsel %vm183, %v265, 0
    %v282 = vsel %vm183, %v266, 0
    %284 = vmatprep.subr.mxu0 0.0
    %285 = vmatpush1.msra.mxu0 %v267
    %286 = vmatprep.subr.mxu0 0.0
    %287 = vmatpush1.msra.mxu0 %v268
    %288 = vmatprep.subr.mxu0 0.0
    %289 = vmatpush1.msra.mxu0 %v269
    %290 = vmatprep.subr.mxu0 0.0
    %291 = vmatpush1.msra.mxu0 %v270
    %292 = vmatprep.subr.mxu0 0.0
    %293 = vmatpush1.msra.mxu0 0.0
    %294 = vmatprep.subr.mxu0 0.0
    %295 = vmatpush1.msra.mxu0 0.0
    %296 = vmatprep.subr.mxu0 0.0
    %297 = vmatpush1.msra.mxu0 0.0
    %298 = vmatprep.subr.mxu0 0.0
    %299 = vmatpush1.msra.mxu0 0.0
    %300 = vmatprep.subr.mxu0 0.0
    %301 = vmatpush1.msra.mxu0 0.0
    %302 = vmatprep.subr.mxu0 0.0
    %303 = vmatpush1.msra.mxu0 0.0
    %304 = vmatprep.subr.mxu0 0.0
    %305 = vmatpush1.msra.mxu0 0.0
    %306 = vmatprep.subr.mxu0 0.0
    %307 = vmatpush1.msra.mxu0 0.0
    %308 = vmatprep.subr.mxu0 0.0
    %309 = vmatpush1.msra.mxu0 0.0
    %310 = vmatprep.subr.mxu0 0.0
    %311 = vmatpush1.msra.mxu0 0.0
    %312 = vmatprep.subr.mxu0 0.0
    %313 = vmatpush1.msra.mxu0 0.0
    %314 = vmatprep.subr.mxu0 0.0
    %315 = vmatpush1.msra.mxu0 0.0
    %316 = vmatprep.subr.mxu0 0.0
    %317 = vmatpush1.msra.mxu0 0.0
    %318 = vmatprep.subr.mxu0 0.0
    %319 = vmatpush1.msra.mxu0 0.0
    %320 = vmatprep.subr.mxu0 0.0
    %321 = vmatpush1.msra.mxu0 0.0
    %322 = vmatprep.subr.mxu0 0.0
    %323 = vmatpush1.msra.mxu0 0.0
    %324 = vmatprep.subr.mxu0 0.0
    %325 = vmatpush1.msra.mxu0 0.0
    %326 = vmatprep.subr.mxu0 0.0
    %327 = vmatpush1.msra.mxu0 0.0
    %328 = vmatprep.subr.mxu0 0.0
    %329 = vmatpush1.msra.mxu0 0.0
    %330 = vmatprep.subr.mxu0 0.0
    %331 = vmatpush1.msra.mxu0 0.0
    %332 = vmatprep.subr.mxu0 0.0
    %333 = vmatpush1.msra.mxu0 0.0
    %334 = vmatprep.subr.mxu0 0.0
    %335 = vmatpush1.msra.mxu0 0.0
    %336 = vmatprep.subr.mxu0 0.0
    %337 = vmatpush1.msra.mxu0 0.0
    %338 = vmatprep.subr.mxu0 0.0
    %339 = vmatpush1.msra.mxu0 0.0
    %340 = vmatprep.subr.mxu0 0.0
    %341 = vmatpush1.msra.mxu0 0.0
    %342 = vmatprep.subr.mxu0 0.0
    %343 = vmatpush1.msra.mxu0 0.0
    %344 = vmatprep.subr.mxu0 0.0
    %345 = vmatpush1.msra.mxu0 0.0
    %346 = vmatprep.subr.mxu0 0.0
    %347 = vmatpush1.msra.mxu0 0.0
    %348 = vmatprep.mubr.f32.mxu0 0.0
    %349 = vmatmul.mubr.f32.gmra.mrb[0].mxu0 %v279
    %v350 = vpop.f32.mrb[0].mxu0
    %v351 = vadd.f32 %v276, %v350
    %v352 = vpop.f32.mrb[0].mxu0
    %353 = vmatprep.mubr.f32.mxu0 0.0
    %354 = vmatmul.mubr.f32.gmra.mrb[0].mxu0 %v282
    %v355 = vpop.f32.mrb[0].mxu0
    %v356 = vadd.f32 %v276, %v355
    %v357 = vpop.f32.mrb[0].mxu0
    %358 = vdwg.mxu0
    %v359 = vmax.f32 %v351, 0.0
    %v360 = vmax.f32 %v356, 0.0
    %v361 = vld [vmem:[%s7] sm:$0xff]
    %v363 = vsel %vm183, %v361, 0
    %v366 = vsel %vm183, %v359, 0
    %v369 = vsel %vm183, %v360, 0
    %371 = vmatprep.subr.mxu0 0.0
    %372 = vmatpush1.xpose.msra.mxu0 %v366
    %373 = vmatprep.subr.mxu0 0.0
    %374 = vmatpush1.xpose.msra.mxu0 %v369
    %375 = vmatprep.subr.mxu0 0.0
    %376 = vmatpush1.xpose.msra.mxu0 0.0
    %377 = vmatprep.subr.mxu0 0.0
    %378 = vmatpush1.xpose.msra.mxu0 0.0
    %379 = vmatprep.subr.mxu0 0.0
    %380 = vmatpush1.xpose.msra.mxu0 0.0
    %381 = vmatprep.subr.mxu0 0.0
    %382 = vmatpush1.xpose.msra.mxu0 0.0
    %383 = vmatprep.subr.mxu0 0.0
    %384 = vmatpush1.xpose.msra.mxu0 0.0
    %385 = vmatprep.subr.mxu0 0.0
    %386 = vmatpush1.xpose.msra.mxu0 0.0
    %387 = vmatprep.subr.mxu0 0.0
    %388 = vmatpush1.xpose.msra.mxu0 0.0
    %389 = vmatprep.subr.mxu0 0.0
    %390 = vmatpush1.xpose.msra.mxu0 0.0
    %391 = vmatprep.subr.mxu0 0.0
    %392 = vmatpush1.xpose.msra.mxu0 0.0
    %393 = vmatprep.subr.mxu0 0.0
    %394 = vmatpush1.xpose.msra.mxu0 0.0
    %395 = vmatprep.subr.mxu0 0.0
    %396 = vmatpush1.xpose.msra.mxu0 0.0
    %397 = vmatprep.subr.mxu0 0.0
    %398 = vmatpush1.xpose.msra.mxu0 0.0
    %399 = vmatprep.subr.mxu0 0.0
    %400 = vmatpush1.xpose.msra.mxu0 0.0
    %401 = vmatprep.subr.mxu0 0.0
    %402 = vmatpush1.xpose.msra.mxu0 0.0
    %403 = vmatprep.subr.mxu0 0.0
    %404 = vmatpush1.xpose.msra.mxu0 0.0
    %405 = vmatprep.subr.mxu0 0.0
    %406 = vmatpush1.xpose.msra.mxu0 0.0
    %407 = vmatprep.subr.mxu0 0.0
    %408 = vmatpush1.xpose.msra.mxu0 0.0
    %409 = vmatprep.subr.mxu0 0.0
    %410 = vmatpush1.xpose.msra.mxu0 0.0
    %411 = vmatprep.subr.mxu0 0.0
    %412 = vmatpush1.xpose.msra.mxu0 0.0
    %413 = vmatprep.subr.mxu0 0.0
    %414 = vmatpush1.xpose.msra.mxu0 0.0
    %415 = vmatprep.subr.mxu0 0.0
    %416 = vmatpush1.xpose.msra.mxu0 0.0
    %417 = vmatprep.subr.mxu0 0.0
    %418 = vmatpush1.xpose.msra.mxu0 0.0
    %419 = vmatprep.subr.mxu0 0.0
    %420 = vmatpush1.xpose.msra.mxu0 0.0
    %421 = vmatprep.subr.mxu0 0.0
    %422 = vmatpush1.xpose.msra.mxu0 0.0
    %423 = vmatprep.subr.mxu0 0.0
    %424 = vmatpush1.xpose.msra.mxu0 0.0
    %425 = vmatprep.subr.mxu0 0.0
    %426 = vmatpush1.xpose.msra.mxu0 0.0
    %427 = vmatprep.subr.mxu0 0.0
    %428 = vmatpush1.xpose.msra.mxu0 0.0
    %429 = vmatprep.subr.mxu0 0.0
    %430 = vmatpush1.xpose.msra.mxu0 0.0
    %431 = vmatprep.subr.mxu0 0.0
    %432 = vmatpush1.xpose.msra.mxu0 0.0
    %433 = vmatprep.subr.mxu0 0.0
    %434 = vmatpush1.xpose.msra.mxu0 0.0
    %435 = vmatprep.mubr.f32.mxu0 0.0
    %436 = vmatmul.mubr.f32.gmra.mrb[0].mxu0 %v363
    %v437 = vpop.f32.mrb[0].mxu0
    %v438 = vadd.f32 0.0, %v437
    %v439 = vpop.f32.mrb[0].mxu0
    %440 = vdwg.mxu0
    %v441 = vld [vmem:[#allocation2] sm:$0x1]
    %443 = vset.pattern.permute.xlu0 0
    %444 = vperm.xlu0 %443, %v441
    %v445 = vpop.permute.xlu0 %444
    %v447 = vlaneseq
    %v448 = vshrl.u32 %v447, 7
    %v449 = vsub.s32 0, %v448
    %v450 = vrot.slane %v445, %v449
    %v451 = vadd.f32 %v438, %v450
    %vm452 = vcmask 122880
    %453 = vst.msk [vmem:[#allocation9] sm:$0x1] %vm452, %v451
    // Predicated region
    $region50: #{_lambda_.1} parent=1 // pred_check
      _
    $region51: #{_lambda_.1} parent=1 // pred_check_branch
      %455 = sbr.rel (0) target = $region53
    $region52: #{_lambda_.1} parent=1 // pred_region
      %s457 = ssub.s32 16, 16
      %458 = vsyncadd [#allocation5], %s457
      %s460 = sshll.u32 [#allocation9], 4
      %s461 = int_to_ptr.vmem [resolvable:$true] %s460
      %463 = dma.vmem_to_hbm [thread:$0]  %s461, 16, %s9, [#allocation5]
    $region53: #{_lambda_.1} parent=1 // pred_fallthru
      _
    // Predicated region
    $region54: #{_lambda_.1} parent=1 // pred_check
      _
    $region55: #{_lambda_.1} parent=1 // pred_check_branch
      %465 = sbr.rel (0) target = $region57
    $region56: #{_lambda_.1} parent=1 // pred_region
      %466 = dma.done [#allocation5], 16
    $region57: #{_lambda_.1} parent=1 // pred_fallthru
      _
    %467 = vsyncpa [#allocation4], 1
    %468 = vsyncpa [#allocation7], 1
    %469 = vsyncpa [#allocation5], 1

</llo_original>
